<compile_context>
chip_gen: v7x
topology: tpu7x:2x2x1
jax: 0.10.0
libtpu: 0.0.40
codegen_flags: <defaults>
</compile_context>

<pallas_src>
import jax
import jax.numpy as jnp
from jax.experimental import pallas as pl
from jax.experimental.pallas import tpu as pltpu


def _round_up(x, m):
    return ((x + m - 1) // m) * m


def _sublane_for(dtype):
    """Minimum sublane multiple for the second-to-last dim, by element width."""
    itemsize = jnp.dtype(dtype).itemsize
    if itemsize >= 4:
        return 8
    if itemsize == 2:
        return 16
    return 32


# Scoped-VMEM budget reserved for the embedding input double-buffer. 24 MiB
# gives tb = 8192 (f32) / 16384 (bf16) at D = 384 and leaves room under the
# explicit 40 MiB limit (itself well under v7x's 64 MiB physical VMEM).
_EMB_DOUBLE_BUFFER_BUDGET = 24 * 1024 * 1024
_VMEM_LIMIT_BYTES = 40 * 1024 * 1024


def _pick_batch_tile(B, D, dtype, block_b=None):
    sublane = _sublane_for(dtype)
    itemsize = jnp.dtype(dtype).itemsize

    # Cap so the double-buffered embedding tile fits the VMEM budget.
    tb_cap = _EMB_DOUBLE_BUFFER_BUDGET // (2 * D * itemsize)
    tb_cap = max(sublane, (tb_cap // sublane) * sublane)

    # Respect (and defensively align) a user-supplied tile.
    if block_b is not None:
        tb_cap = min(tb_cap, max(sublane, _round_up(block_b, sublane)))

    # Guarantee >= 2 grid steps when B is large enough, so the "parallel"
    # batch axis can shard across v7x's two TensorCores; tiny batches stay
    # a single block.
    half = _round_up(pl.cdiv(B, 2), sublane)
    tb = min(tb_cap, half, _round_up(B, sublane))
    return max(tb, sublane)


def _fc_sigmoid_kernel(x_ref, w_ref, b_ref, probs_ref):
    # x_ref: [TB, D], w_ref: [D, 2], b_ref: [1, 2] -> probs_ref: [TB, 2]
    logits = jnp.dot(x_ref[...], w_ref[...], preferred_element_type=jnp.float32)
    logits = logits + b_ref[...].astype(jnp.float32)   # broadcast [1,2] over [TB,2]
    probs_ref[...] = jax.nn.sigmoid(logits).astype(probs_ref.dtype)


def fcst_forward(embeddings, weight_t, bias, *, block_b=None):
    """Equivalent of FCSTNet.forward on precomputed embeddings.

    embeddings: [B, D] f32 or bf16 (bf16 recommended: halves HBM read)
    weight_t:   [D, 2]  (transposed nn.Linear weight)
    bias:       [1, 2]
    returns:    probs [B, 2] f32
    """
    B, D = embeddings.shape
    assert weight_t.shape == (D, 2)
    assert bias.shape == (1, 2)

    tb = _pick_batch_tile(B, D, embeddings.dtype, block_b)
    grid = (pl.cdiv(B, tb),)

    emb_bytes = B * D * jnp.dtype(embeddings.dtype).itemsize
    w_bytes = D * 2 * jnp.dtype(weight_t.dtype).itemsize
    b_bytes = 2 * jnp.dtype(bias.dtype).itemsize
    out_bytes = B * 2 * 4
    cost = pl.CostEstimate(
        flops=2 * B * D * 2 + B * 2,
        transcendentals=B * 2,
        bytes_accessed=emb_bytes + w_bytes + b_bytes + out_bytes,
    )

    probs = pl.pallas_call(
        _fc_sigmoid_kernel,
        out_shape=jax.ShapeDtypeStruct((B, 2), jnp.float32),
        grid=grid,
        in_specs=[
            pl.BlockSpec((tb, D), lambda i: (i, 0)),
            pl.BlockSpec((D, 2), lambda i: (0, 0)),
            pl.BlockSpec((1, 2), lambda i: (0, 0)),
        ],
        out_specs=pl.BlockSpec((tb, 2), lambda i: (i, 0)),
        compiler_params=pltpu.CompilerParams(
            dimension_semantics=("parallel",),
            vmem_limit_bytes=_VMEM_LIMIT_BYTES,
        ),
        cost_estimate=cost,
    )(embeddings, weight_t, bias)
    return probs


def fcst_predict(embeddings, weight_t, bias, **kw):
    """Equivalent of FCSTNet.predict on precomputed embeddings."""
    probs = fcst_forward(embeddings, weight_t, bias, **kw)
    # sigmoid is monotonic; argmax over probs == argmax over logits.
    return jnp.argmax(probs, axis=1)


if __name__ == "__main__":
    key = jax.random.PRNGKey(0)
    k_emb, k_w, k_b, k_big = jax.random.split(key, 4)

    batch = 8
    input_size = 384  # all-MiniLM-L6-v2 embedding dim

    # Stand-in for SentenceTransformer.encode(x) output.
    embeddings = jax.random.normal(k_emb, (batch, input_size), dtype=jnp.float32)

    # Deterministic Linear(input_size, 2) params (PyTorch-style uniform init bound).
    bound = 1.0 / jnp.sqrt(jnp.float32(input_size))
    weight = jax.random.uniform(k_w, (2, input_size), jnp.float32, -bound, bound)
    bias = jax.random.uniform(k_b, (2,), jnp.float32, -bound, bound)

    weight_t = weight.T                 # [D, 2]
    bias_row = bias.reshape(1, 2)       # [1, 2]

    # f32 path (single grid step at this batch size).
    probs = fcst_forward(embeddings, weight_t, bias_row)
    preds = fcst_predict(embeddings, weight_t, bias_row)
    jax.block_until_ready((probs, preds))

    ref = jax.nn.sigmoid(embeddings @ weight_t + bias_row)
    assert probs.shape == (batch, 2)
    assert jnp.allclose(probs, ref, atol=1e-5, rtol=1e-5)
    assert jnp.array_equal(preds, jnp.argmax(ref, axis=1))

    # Recommended bf16 path (halves HBM traffic; f32 accumulation on MXU),
    # medium batch so the kernel exercises a multi-step "parallel" grid.
    big_batch = 2048
    emb_big = jax.random.normal(k_big, (big_batch, input_size), dtype=jnp.bfloat16)
    w_bf16 = weight_t.astype(jnp.bfloat16)
    probs_bf16 = fcst_forward(emb_big, w_bf16, bias_row)
    preds_bf16 = fcst_predict(emb_big, w_bf16, bias_row)
    jax.block_until_ready((probs_bf16, preds_bf16))
    ref_bf16 = jax.nn.sigmoid(
        emb_big.astype(jnp.float32) @ w_bf16.astype(jnp.float32) + bias_row
    )
    assert probs_bf16.shape == (big_batch, 2)
    assert jnp.allclose(probs_bf16, ref_bf16, atol=3e-2)
    assert jnp.array_equal(preds_bf16, jnp.argmax(ref_bf16, axis=1))

    print("KERNEL_OK")
</pallas_src>

<mosaic_0001>
module attributes {stable_mosaic.version = 11 : i64} {
  func.func @_fc_sigmoid_kernel(%arg0: i32, %arg1: memref<8x384xf32, #tpu.memory_space<vmem>>, %arg2: memref<384x2xf32, #tpu.memory_space<vmem>>, %arg3: memref<1x2xf32, #tpu.memory_space<vmem>>, %arg4: memref<8x2xf32, #tpu.memory_space<vmem>>) attributes {dimension_semantics = [#tpu.dimension_semantics<parallel>], iteration_bounds = array<i64: 1>, scalar_prefetch = 0 : i64, scratch_operands = 0 : i64, tpu.core_type = #tpu.core_type<tc>, window_params = [{transform_indices = @transform_0, window_bounds = array<i64: 8, 384>}, {pipeline_mode = #tpu.pipeline_mode<synchronous>, transform_indices = @transform_1, window_bounds = array<i64: 384, 2>}, {pipeline_mode = #tpu.pipeline_mode<synchronous>, transform_indices = @transform_2, window_bounds = array<i64: 1, 2>}, {transform_indices = @transform_3, window_bounds = array<i64: 8, 2>}]} {
    %c0 = arith.constant 0 : index
    %c0_0 = arith.constant 0 : index
    %0 = vector.load %arg1[%c0, %c0_0] : memref<8x384xf32, #tpu.memory_space<vmem>>, vector<8x384xf32>
    %c0_1 = arith.constant 0 : index
    %c0_2 = arith.constant 0 : index
    %1 = vector.load %arg2[%c0_1, %c0_2] : memref<384x2xf32, #tpu.memory_space<vmem>>, vector<384x2xf32>
    %cst = arith.constant dense<0.000000e+00> : vector<8x2xf32>
    %2 = tpu.matmul %0, %1, %cst {dimension_numbers = #tpu.dot_dimension_numbers<[1], [0], [0], [1], [0, 0, 1, 1], [], []>} : vector<8x384xf32>, vector<384x2xf32>, vector<8x2xf32> -> vector<8x2xf32>
    %c0_3 = arith.constant 0 : index
    %c0_4 = arith.constant 0 : index
    %3 = vector.load %arg3[%c0_3, %c0_4] : memref<1x2xf32, #tpu.memory_space<vmem>>, vector<1x2xf32>
    %4 = vector.broadcast %3 : vector<1x2xf32> to vector<8x2xf32>
    %5 = arith.addf %2, %4 : vector<8x2xf32>
    %6 = arith.negf %5 : vector<8x2xf32>
    %7 = math.exp %6 : vector<8x2xf32>
    %cst_5 = arith.constant 1.000000e+00 : f32
    %8 = vector.broadcast %cst_5 : f32 to vector<8x2xf32>
    %9 = arith.addf %8, %7 : vector<8x2xf32>
    %10 = arith.divf %8, %9 : vector<8x2xf32>
    %c0_6 = arith.constant 0 : index
    %c0_7 = arith.constant 0 : index
    %11 = vector.load %arg4[%c0_6, %c0_7] : memref<8x2xf32, #tpu.memory_space<vmem>>, vector<8x2xf32>
    tpu.vector_store %arg4[%c0_6, %c0_7], %10 {strides = array<i32>} : memref<8x2xf32, #tpu.memory_space<vmem>>, vector<8x2xf32>,
    return
  }
  func.func @transform_0(%arg0: i32) -> (i32, i32) {
    %c0_i32 = arith.constant 0 : i32
    %c0_i32_0 = arith.constant 0 : i32
    return %arg0, %c0_i32 : i32, i32
  }
  func.func @transform_1(%arg0: i32) -> (i32, i32) {
    %c0_i32 = arith.constant 0 : i32
    %c0_i32_0 = arith.constant 0 : i32
    %c0_i32_1 = arith.constant 0 : i32
    return %c0_i32, %c0_i32_0 : i32, i32
  }
  func.func @transform_2(%arg0: i32) -> (i32, i32) {
    %c0_i32 = arith.constant 0 : i32
    %c0_i32_0 = arith.constant 0 : i32
    %c0_i32_1 = arith.constant 0 : i32
    return %c0_i32, %c0_i32_0 : i32, i32
  }
  func.func @transform_3(%arg0: i32) -> (i32, i32) {
    %c0_i32 = arith.constant 0 : i32
    %c0_i32_0 = arith.constant 0 : i32
    return %arg0, %c0_i32 : i32, i32
  }
}

</mosaic_0001>

<llo_original>
// kernel: tpu_custom_call.1
$region0: #{tpu_custom_call.1}
  #allocation0 [shape = 'u32[]', space=smem, size = 0x4, offset = 0x4, fixed_abs, tag = 'smem constant byte address 0x4 - core index']
  #allocation1 [shape = 'u32[144,128]{1,0:T(1,128)}', space=vmem, size = 0x12000, scoped, tag = 'internal scratch']
  %s0 = inlined_call_operand.vmem [shape: f32[8,384], index: 0, kind: input, shape index: {}]
  %s1 = inlined_call_operand.vmem [shape: f32[384,2], index: 1, kind: input, shape index: {}]
  %s2 = inlined_call_operand.vmem [shape: f32[1,2], index: 2, kind: input, shape index: {}]
  %s3 = inlined_call_operand.vmem [shape: f32[8,2], index: 3, kind: output, shape index: {}]
  %s4 = sld [smem:[#allocation0]]
  $region22: #{tpu_custom_call.1} parent=0
    _
  %s6 = ssub.s32 1, %s4
  %s7 = scalar_select 0, %s6, %s4
  // Predicated region
  $region2: #{tpu_custom_call.1} parent=0 // pred_check
    _
  $region3: #{tpu_custom_call.1} parent=0 // pred_check_branch
    %9 = sbr.rel (0) target = $region5
  $region4: #{tpu_custom_call.1} parent=0 // pred_region
    _
  $region5: #{tpu_custom_call.1} parent=0 // pred_fallthru
    _
  // Predicated region
  $region6: #{tpu_custom_call.1} parent=0 // pred_check
    _
  $region7: #{tpu_custom_call.1} parent=0 // pred_check_branch
    %11 = sbr.rel (0) target = $region9
  $region8: #{tpu_custom_call.1} parent=0 // pred_region
    _
  $region9: #{tpu_custom_call.1} parent=0 // pred_fallthru
    _
  // Predicated region
  $region10: #{tpu_custom_call.1} parent=0 // pred_check
    _
  $region11: #{tpu_custom_call.1} parent=0 // pred_check_branch
    %13 = sbr.rel (0) target = $region13
  $region12: #{tpu_custom_call.1} parent=0 // pred_region
    _
  $region13: #{tpu_custom_call.1} parent=0 // pred_fallthru
    _
  %v14 = vld [vmem:[%s0] sm:$0xff]
  %v15 = vld [vmem:[%s0 + $0x8] sm:$0xff]
  %v16 = vld [vmem:[%s0 + $0x10] sm:$0xff]
  %v17 = vld [vmem:[%s1] sm:$0xff]
  %v18 = vld [vmem:[%s1 + $0x8] sm:$0xff]
  %v19 = vld [vmem:[%s1 + $0x10] sm:$0xff]
  %v20 = vld [vmem:[%s1 + $0x18] sm:$0xff]
  %v21 = vld [vmem:[%s1 + $0x20] sm:$0xff]
  %v22 = vld [vmem:[%s1 + $0x28] sm:$0xff]
  %v23 = vld [vmem:[%s1 + $0x30] sm:$0xff]
  %v24 = vld [vmem:[%s1 + $0x38] sm:$0xff]
  %v25 = vld [vmem:[%s1 + $0x40] sm:$0xff]
  %v26 = vld [vmem:[%s1 + $0x48] sm:$0xff]
  %v27 = vld [vmem:[%s1 + $0x50] sm:$0xff]
  %v28 = vld [vmem:[%s1 + $0x58] sm:$0xff]
  %v29 = vld [vmem:[%s1 + $0x60] sm:$0xff]
  %v30 = vld [vmem:[%s1 + $0x68] sm:$0xff]
  %v31 = vld [vmem:[%s1 + $0x70] sm:$0xff]
  %v32 = vld [vmem:[%s1 + $0x78] sm:$0xff]
  %v33 = vld [vmem:[%s1 + $0x80] sm:$0xff]
  %v34 = vld [vmem:[%s1 + $0x88] sm:$0xff]
  %v35 = vld [vmem:[%s1 + $0x90] sm:$0xff]
  %v36 = vld [vmem:[%s1 + $0x98] sm:$0xff]
  %v37 = vld [vmem:[%s1 + $0xa0] sm:$0xff]
  %v38 = vld [vmem:[%s1 + $0xa8] sm:$0xff]
  %v39 = vld [vmem:[%s1 + $0xb0] sm:$0xff]
  %v40 = vld [vmem:[%s1 + $0xb8] sm:$0xff]
  %v41 = vld [vmem:[%s1 + $0xc0] sm:$0xff]
  %v42 = vld [vmem:[%s1 + $0xc8] sm:$0xff]
  %v43 = vld [vmem:[%s1 + $0xd0] sm:$0xff]
  %v44 = vld [vmem:[%s1 + $0xd8] sm:$0xff]
  %v45 = vld [vmem:[%s1 + $0xe0] sm:$0xff]
  %v46 = vld [vmem:[%s1 + $0xe8] sm:$0xff]
  %v47 = vld [vmem:[%s1 + $0xf0] sm:$0xff]
  %v48 = vld [vmem:[%s1 + $0xf8] sm:$0xff]
  %v49 = vld [vmem:[%s1 + $0x100] sm:$0xff]
  %v50 = vld [vmem:[%s1 + $0x108] sm:$0xff]
  %v51 = vld [vmem:[%s1 + $0x110] sm:$0xff]
  %v52 = vld [vmem:[%s1 + $0x118] sm:$0xff]
  %v53 = vld [vmem:[%s1 + $0x120] sm:$0xff]
  %v54 = vld [vmem:[%s1 + $0x128] sm:$0xff]
  %v55 = vld [vmem:[%s1 + $0x130] sm:$0xff]
  %v56 = vld [vmem:[%s1 + $0x138] sm:$0xff]
  %v57 = vld [vmem:[%s1 + $0x140] sm:$0xff]
  %v58 = vld [vmem:[%s1 + $0x148] sm:$0xff]
  %v59 = vld [vmem:[%s1 + $0x150] sm:$0xff]
  %v60 = vld [vmem:[%s1 + $0x158] sm:$0xff]
  %v61 = vld [vmem:[%s1 + $0x160] sm:$0xff]
  %v62 = vld [vmem:[%s1 + $0x168] sm:$0xff]
  %v63 = vld [vmem:[%s1 + $0x170] sm:$0xff]
  %v64 = vld [vmem:[%s1 + $0x178] sm:$0xff]
  %v65 = vld [vmem:[%s2] sm:$0x1]
  %v67 = vlaneseq
  %v68 = vshrl.u32 %v67, 7
  %v69 = vsub.s32 0, %v68
  %v70 = vrot.slane %v65, %v69
  %72 = vmatprep.subr.mxu0 0.0
  %73 = vmatpush1.msra.mxu0 %v17
  %74 = vmatprep.subr.mxu0 0.0
  %75 = vmatpush1.msra.mxu0 %v18
  %76 = vmatprep.subr.mxu0 0.0
  %77 = vmatpush1.msra.mxu0 %v19
  %78 = vmatprep.subr.mxu0 0.0
  %79 = vmatpush1.msra.mxu0 %v20
  %80 = vmatprep.subr.mxu0 0.0
  %81 = vmatpush1.msra.mxu0 %v21
  %82 = vmatprep.subr.mxu0 0.0
  %83 = vmatpush1.msra.mxu0 %v22
  %84 = vmatprep.subr.mxu0 0.0
  %85 = vmatpush1.msra.mxu0 %v23
  %86 = vmatprep.subr.mxu0 0.0
  %87 = vmatpush1.msra.mxu0 %v24
  %88 = vmatprep.subr.mxu0 0.0
  %89 = vmatpush1.msra.mxu0 %v25
  %90 = vmatprep.subr.mxu0 0.0
  %91 = vmatpush1.msra.mxu0 %v26
  %92 = vmatprep.subr.mxu0 0.0
  %93 = vmatpush1.msra.mxu0 %v27
  %94 = vmatprep.subr.mxu0 0.0
  %95 = vmatpush1.msra.mxu0 %v28
  %96 = vmatprep.subr.mxu0 0.0
  %97 = vmatpush1.msra.mxu0 %v29
  %98 = vmatprep.subr.mxu0 0.0
  %99 = vmatpush1.msra.mxu0 %v30
  %100 = vmatprep.subr.mxu0 0.0
  %101 = vmatpush1.msra.mxu0 %v31
  %102 = vmatprep.subr.mxu0 0.0
  %103 = vmatpush1.msra.mxu0 %v32
  %104 = vmatprep.subr.mxu0 0.0
  %105 = vmatpush1.msra.mxu0 %v33
  %106 = vmatprep.subr.mxu0 0.0
  %107 = vmatpush1.msra.mxu0 %v34
  %108 = vmatprep.subr.mxu0 0.0
  %109 = vmatpush1.msra.mxu0 %v35
  %110 = vmatprep.subr.mxu0 0.0
  %111 = vmatpush1.msra.mxu0 %v36
  %112 = vmatprep.subr.mxu0 0.0
  %113 = vmatpush1.msra.mxu0 %v37
  %114 = vmatprep.subr.mxu0 0.0
  %115 = vmatpush1.msra.mxu0 %v38
  %116 = vmatprep.subr.mxu0 0.0
  %117 = vmatpush1.msra.mxu0 %v39
  %118 = vmatprep.subr.mxu0 0.0
  %119 = vmatpush1.msra.mxu0 %v40
  %120 = vmatprep.subr.mxu0 0.0
  %121 = vmatpush1.msra.mxu0 %v41
  %122 = vmatprep.subr.mxu0 0.0
  %123 = vmatpush1.msra.mxu0 %v42
  %124 = vmatprep.subr.mxu0 0.0
  %125 = vmatpush1.msra.mxu0 %v43
  %126 = vmatprep.subr.mxu0 0.0
  %127 = vmatpush1.msra.mxu0 %v44
  %128 = vmatprep.subr.mxu0 0.0
  %129 = vmatpush1.msra.mxu0 %v45
  %130 = vmatprep.subr.mxu0 0.0
  %131 = vmatpush1.msra.mxu0 %v46
  %132 = vmatprep.subr.mxu0 0.0
  %133 = vmatpush1.msra.mxu0 %v47
  %134 = vmatprep.subr.mxu0 0.0
  %135 = vmatpush1.msra.mxu0 %v48
  %136 = vmatprep.mubr.f32.mxu0 %v15
  %137 = vmatmul.mubr.f32.gmra.mrb[0].mxu0 %v14
  %v138 = vpop.f32.mrb[0].mxu0
  %v139 = vadd.f32 %v70, %v138
  %v140 = vpop.f32.mrb[0].mxu0
  %141 = vdwg.mxu0
  %142 = vmatprep.subr.mxu0 0.0
  %143 = vmatpush1.msra.mxu0 %v49
  %144 = vmatprep.subr.mxu0 0.0
  %145 = vmatpush1.msra.mxu0 %v50
  %146 = vmatprep.subr.mxu0 0.0
  %147 = vmatpush1.msra.mxu0 %v51
  %148 = vmatprep.subr.mxu0 0.0
  %149 = vmatpush1.msra.mxu0 %v52
  %150 = vmatprep.subr.mxu0 0.0
  %151 = vmatpush1.msra.mxu0 %v53
  %152 = vmatprep.subr.mxu0 0.0
  %153 = vmatpush1.msra.mxu0 %v54
  %154 = vmatprep.subr.mxu0 0.0
  %155 = vmatpush1.msra.mxu0 %v55
  %156 = vmatprep.subr.mxu0 0.0
  %157 = vmatpush1.msra.mxu0 %v56
  %158 = vmatprep.subr.mxu0 0.0
  %159 = vmatpush1.msra.mxu0 %v57
  %160 = vmatprep.subr.mxu0 0.0
  %161 = vmatpush1.msra.mxu0 %v58
  %162 = vmatprep.subr.mxu0 0.0
  %163 = vmatpush1.msra.mxu0 %v59
  %164 = vmatprep.subr.mxu0 0.0
  %165 = vmatpush1.msra.mxu0 %v60
  %166 = vmatprep.subr.mxu0 0.0
  %167 = vmatpush1.msra.mxu0 %v61
  %168 = vmatprep.subr.mxu0 0.0
  %169 = vmatpush1.msra.mxu0 %v62
  %170 = vmatprep.subr.mxu0 0.0
  %171 = vmatpush1.msra.mxu0 %v63
  %172 = vmatprep.subr.mxu0 0.0
  %173 = vmatpush1.msra.mxu0 %v64
  %174 = vmatprep.subr.mxu0 0.0
  %175 = vmatpush1.msra.mxu0 0.0
  %176 = vmatprep.subr.mxu0 0.0
  %177 = vmatpush1.msra.mxu0 0.0
  %178 = vmatprep.subr.mxu0 0.0
  %179 = vmatpush1.msra.mxu0 0.0
  %180 = vmatprep.subr.mxu0 0.0
  %181 = vmatpush1.msra.mxu0 0.0
  %182 = vmatprep.subr.mxu0 0.0
  %183 = vmatpush1.msra.mxu0 0.0
  %184 = vmatprep.subr.mxu0 0.0
  %185 = vmatpush1.msra.mxu0 0.0
  %186 = vmatprep.subr.mxu0 0.0
  %187 = vmatpush1.msra.mxu0 0.0
  %188 = vmatprep.subr.mxu0 0.0
  %189 = vmatpush1.msra.mxu0 0.0
  %190 = vmatprep.subr.mxu0 0.0
  %191 = vmatpush1.msra.mxu0 0.0
  %192 = vmatprep.subr.mxu0 0.0
  %193 = vmatpush1.msra.mxu0 0.0
  %194 = vmatprep.subr.mxu0 0.0
  %195 = vmatpush1.msra.mxu0 0.0
  %196 = vmatprep.subr.mxu0 0.0
  %197 = vmatpush1.msra.mxu0 0.0
  %198 = vmatprep.subr.mxu0 0.0
  %199 = vmatpush1.msra.mxu0 0.0
  %200 = vmatprep.subr.mxu0 0.0
  %201 = vmatpush1.msra.mxu0 0.0
  %202 = vmatprep.subr.mxu0 0.0
  %203 = vmatpush1.msra.mxu0 0.0
  %204 = vmatprep.subr.mxu0 0.0
  %205 = vmatpush1.msra.mxu0 0.0
  %206 = vmatprep.mubr.f32.mxu0 0.0
  %207 = vmatmul.mubr.f32.gmra.mrb[0].mxu0 %v16
  %v208 = vpop.f32.mrb[0].mxu0
  %v209 = vadd.f32 %v139, %v208
  %v210 = vpop.f32.mrb[0].mxu0
  %211 = vdwg.mxu0
  %v212 = vxor.u32 %v209, 2147483648
  %v213 = vmul.f32 %v212, 1.442695
  %v214 = vpow.pop %v213
  %v215 = vadd.f32 %v214, 1.0
  %v216 = vrcp.pop %v215
  %v217 = vmul.f32 1.0, %v216
  %vm218 = vcmask 15360
  %219 = vst.msk [vmem:[%s3] sm:$0xff] %vm218, %v217
  // Predicated region
  $region14: #{tpu_custom_call.1} parent=0 // pred_check
    _
  $region15: #{tpu_custom_call.1} parent=0 // pred_check_branch
    %221 = sbr.rel (0) target = $region17
  $region16: #{tpu_custom_call.1} parent=0 // pred_region
    _
  $region17: #{tpu_custom_call.1} parent=0 // pred_fallthru
    _
  // Predicated region
  $region18: #{tpu_custom_call.1} parent=0 // pred_check
    _
  $region19: #{tpu_custom_call.1} parent=0 // pred_check_branch
    %223 = sbr.rel (0) target = $region21
  $region20: #{tpu_custom_call.1} parent=0 // pred_region
    _
  $region21: #{tpu_custom_call.1} parent=0 // pred_fallthru
    _

</llo_original>
